<compile_context>
chip_gen: v6e
topology: v6e:2x2x1
jax: 0.10.0
libtpu: 0.0.40
codegen_flags: <defaults>
</compile_context>

<pallas_src>
import functools

import jax
import jax.numpy as jnp
from jax.experimental import pallas as pl
from jax.experimental.pallas import tpu as pltpu

LANE = 128             # feature (lane) dims padded to multiples of this
SUBLANE = 8            # f32 sublane granularity for batch padding
TILE_B_MAX = 1024      # batch-tile rows; large tiles amortize per-grid-step overhead
SPLIT_THRESHOLD = 512  # if B >= this, force >=2 batch tiles so both v7x TCs get work


def _round_up(v, m):
    return (v + m - 1) // m * m


def _fused_mlp_kernel(*refs, n_layers):
    """refs = (x_ref, w0, b0, w1, b1, ..., w_{L-1}, b_{L-1}, o_ref).

    All layers chained in one body: activations stay in vregs/VMEM, weights are
    resident full-array blocks (constant index_map, single-buffered).
    """
    x_ref = refs[0]
    o_ref = refs[-1]
    h = x_ref[...].astype(jnp.float32)                # (tile_b, f_in)
    for i in range(n_layers):
        w = refs[1 + 2 * i][...]                      # (f_in_p, f_out_p)
        b = refs[2 + 2 * i][...]                      # (1, f_out_p) f32 -> broadcasts
        h = jnp.dot(h.astype(w.dtype), w, preferred_element_type=jnp.float32) + b
        if i < n_layers - 1:
            # EUP exp + reciprocal, kept in f32 (exact match with the reference,
            # and v5e's VPU/EUP have no bf16 path anyway).
            h = jax.nn.sigmoid(h)
    o_ref[...] = h.astype(o_ref.dtype)


def init_params(key, input_features, output_features, hidden_units, layer_count):
    """Deterministic synthetic parameters, PyTorch layout: weight (f_out, f_in)."""
    dims = [input_features, hidden_units] + [hidden_units] * layer_count + [output_features]
    params = []
    for i in range(len(dims) - 1):
        f_in, f_out = dims[i], dims[i + 1]
        kw, kb, key = jax.random.split(key, 3)
        bound = 1.0 / jnp.sqrt(jnp.float32(f_in))     # nn.Linear default init
        w = jax.random.uniform(kw, (f_out, f_in), jnp.float32, -bound, bound)
        b = jax.random.uniform(kb, (f_out,), jnp.float32, -bound, bound)
        params.append((w, b))
    return params


def prepare_params(params, *, use_bf16_weights=False):
    """One-time prep: transpose to (f_in, f_out); pad ONLY output (lane) dims to 128.

    The first layer's input dim stays unpadded (matches x -> no K-pad HLO on x);
    later layers' input dims are padded to the previous layer's padded output with
    zero rows, so sigmoid(0)=0.5 in padded activation columns contributes nothing.
    """
    prepped = []
    prev_out_p = params[0][0].shape[1]                # = input_features, unpadded
    for w, b in params:
        f_out, f_in = w.shape
        f_in_p = prev_out_p
        f_out_p = _round_up(f_out, LANE)
        w_dt = jnp.bfloat16 if use_bf16_weights else w.dtype
        w_t = jnp.zeros((f_in_p, f_out_p), w_dt).at[:f_in, :f_out].set(w.T.astype(w_dt))
        b2 = jnp.zeros((1, f_out_p), jnp.float32).at[0, :f_out].set(b)
        prepped.append((w_t, b2))
        prev_out_p = f_out_p
    return prepped


def _resident_spec(block_shape):
    """Full-array block, constant index_map, single-buffered (no double-buffer waste)."""
    index_map = lambda i: (0,) * len(block_shape)
    try:
        return pl.BlockSpec(block_shape, index_map, pipeline_mode=pl.Buffered(1))
    except (TypeError, AttributeError):   # older JAX without pipeline_mode/Buffered
        return pl.BlockSpec(block_shape, index_map)


def _vmem_limit_bytes(prepped, tile_b, f_in, f_out_p):
    """Resident weights (single-buffered) + double-buffered x/out tiles + activations,
    with ~50% headroom, clamped to ~90% of this chip's physical VMEM."""
    w_bytes = sum(w.size * w.dtype.itemsize + b.size * b.dtype.itemsize for w, b in prepped)
    x_bytes = tile_b * f_in * 4
    o_bytes = tile_b * f_out_p * 4
    act_bytes = sum(tile_b * w.shape[1] * 4 for w, _ in prepped)
    needed = w_bytes + 2 * (x_bytes + o_bytes) + act_bytes
    limit = max(int(needed * 3 // 2) + (4 << 20), 32 << 20)
    try:
        phys = pltpu.get_tpu_info().vmem_capacity_bytes
    except Exception:
        phys = 64 << 20                   # v7x has the smallest per-TC VMEM
    return int(min(limit, int(phys * 0.9)))


def classifier_model_sigmoid_forward(x, prepped, out_features, *, tile_b_max=TILE_B_MAX):
    """Fused forward pass equivalent to ClassifierModelSigmoid.forward.

    x       : (B, input_features) float32
    prepped : output of prepare_params (pre-transposed, lane-padded weights/biases)
    """
    B, f_in = x.shape
    f_out_p = prepped[-1][0].shape[1]
    n_layers = len(prepped)

    # Balanced batch tiles: minimal padding; >=2 even tiles for large B so the
    # "parallel" grid axis actually feeds both v7x TensorCores.
    n_tiles = max(-(-B // tile_b_max), 2 if B >= SPLIT_THRESHOLD else 1)
    if n_tiles > 1:
        n_tiles = _round_up(n_tiles, 2)
        tile_b = _round_up(-(-B // n_tiles), SUBLANE)
        B_p = n_tiles * tile_b
    else:
        tile_b = B                        # single full-extent tile, no padding at all
        B_p = B

    # Rows-only padding when tiling requires it; never pad the K (feature) dim.
    x_p = x if B_p == B else jnp.pad(x, ((0, B_p - B), (0, 0)))

    flat_args = [x_p]
    in_specs = [pl.BlockSpec((tile_b, f_in), lambda i: (i, 0))]
    for w_t, b2 in prepped:
        flat_args += [w_t, b2]
        in_specs += [_resident_spec(w_t.shape), _resident_spec(b2.shape)]

    kernel = functools.partial(_fused_mlp_kernel, n_layers=n_layers)

    out_p = pl.pallas_call(
        kernel,
        out_shape=jax.ShapeDtypeStruct((B_p, f_out_p), x.dtype),
        grid=(B_p // tile_b,),
        in_specs=in_specs,
        out_specs=pl.BlockSpec((tile_b, f_out_p), lambda i: (i, 0)),
        compiler_params=pltpu.CompilerParams(
            dimension_semantics=("parallel",),       # shard batch tiles across TCs
            vmem_limit_bytes=_vmem_limit_bytes(prepped, tile_b, f_in, f_out_p),
        ),
    )(*flat_args)

    return out_p[:B, :out_features]


def reference_forward(x, params):
    """Plain-JAX reference (PyTorch-layout params) for correctness checking."""
    n = len(params)
    h = x
    for i, (w, b) in enumerate(params):
        h = h @ w.T + b
        if i < n - 1:
            h = jax.nn.sigmoid(h)
    return h


if __name__ == "__main__":
    # Small shapes consistent with the module's constructor.
    input_features = 16
    output_features = 4
    hidden_units = 32
    layer_count = 2
    batch = 8

    key = jax.random.PRNGKey(0)
    key_x, key_p = jax.random.split(key)

    x = jax.random.normal(key_x, (batch, input_features), jnp.float32)
    params = init_params(key_p, input_features, output_features,
                         hidden_units, layer_count)

    # One-time layout prep (transpose + lane-pad) outside the hot path.
    # use_bf16_weights=True would unlock the v6e/v7x bf16 MXU (looser tolerance needed);
    # kept False here so the kernel matches the f32 reference exactly.
    prepped = prepare_params(params, use_bf16_weights=False)

    fwd = jax.jit(lambda xx, pp: classifier_model_sigmoid_forward(xx, pp, output_features))
    out = fwd(x, prepped)
    out = jax.block_until_ready(out)

    ref = reference_forward(x, params)
    assert out.shape == (batch, output_features)
    assert jnp.allclose(out, ref, atol=1e-5, rtol=1e-5)

    print("KERNEL_OK")
</pallas_src>

<mosaic_0001>
module attributes {stable_mosaic.version = 11 : i64} {
  func.func @_fused_mlp_kernel(%arg0: i32, %arg1: memref<8x16xf32, #tpu.memory_space<vmem>>, %arg2: memref<16x128xf32, #tpu.memory_space<vmem>>, %arg3: memref<1x128xf32, #tpu.memory_space<vmem>>, %arg4: memref<128x128xf32, #tpu.memory_space<vmem>>, %arg5: memref<1x128xf32, #tpu.memory_space<vmem>>, %arg6: memref<128x128xf32, #tpu.memory_space<vmem>>, %arg7: memref<1x128xf32, #tpu.memory_space<vmem>>, %arg8: memref<128x128xf32, #tpu.memory_space<vmem>>, %arg9: memref<1x128xf32, #tpu.memory_space<vmem>>, %arg10: memref<8x128xf32, #tpu.memory_space<vmem>>) attributes {dimension_semantics = [#tpu.dimension_semantics<parallel>], iteration_bounds = array<i64: 1>, scalar_prefetch = 0 : i64, scratch_operands = 0 : i64, tpu.core_type = #tpu.core_type<tc>, window_params = [{transform_indices = @transform_0, window_bounds = array<i64: 8, 16>}, {pipeline_mode = #tpu.pipeline_mode<synchronous>, transform_indices = @transform_1, window_bounds = array<i64: 16, 128>}, {pipeline_mode = #tpu.pipeline_mode<synchronous>, transform_indices = @transform_2, window_bounds = array<i64: 1, 128>}, {pipeline_mode = #tpu.pipeline_mode<synchronous>, transform_indices = @transform_3, window_bounds = array<i64: 128, 128>}, {pipeline_mode = #tpu.pipeline_mode<synchronous>, transform_indices = @transform_4, window_bounds = array<i64: 1, 128>}, {pipeline_mode = #tpu.pipeline_mode<synchronous>, transform_indices = @transform_5, window_bounds = array<i64: 128, 128>}, {pipeline_mode = #tpu.pipeline_mode<synchronous>, transform_indices = @transform_6, window_bounds = array<i64: 1, 128>}, {pipeline_mode = #tpu.pipeline_mode<synchronous>, transform_indices = @transform_7, window_bounds = array<i64: 128, 128>}, {pipeline_mode = #tpu.pipeline_mode<synchronous>, transform_indices = @transform_8, window_bounds = array<i64: 1, 128>}, {transform_indices = @transform_9, window_bounds = array<i64: 8, 128>}]} {
    %c0 = arith.constant 0 : index
    %c0_0 = arith.constant 0 : index
    %0 = vector.load %arg1[%c0, %c0_0] : memref<8x16xf32, #tpu.memory_space<vmem>>, vector<8x16xf32>
    %c0_1 = arith.constant 0 : index
    %c0_2 = arith.constant 0 : index
    %1 = vector.load %arg2[%c0_1, %c0_2] : memref<16x128xf32, #tpu.memory_space<vmem>>, vector<16x128xf32>
    %c0_3 = arith.constant 0 : index
    %c0_4 = arith.constant 0 : index
    %2 = vector.load %arg3[%c0_3, %c0_4] : memref<1x128xf32, #tpu.memory_space<vmem>>, vector<1x128xf32>
    %cst = arith.constant dense<0.000000e+00> : vector<8x128xf32>
    %3 = tpu.matmul %0, %1, %cst {dimension_numbers = #tpu.dot_dimension_numbers<[1], [0], [0], [1], [0, 0, 1, 1], [], []>} : vector<8x16xf32>, vector<16x128xf32>, vector<8x128xf32> -> vector<8x128xf32>
    %4 = vector.broadcast %2 : vector<1x128xf32> to vector<8x128xf32>
    %5 = arith.addf %3, %4 : vector<8x128xf32>
    %6 = arith.negf %5 : vector<8x128xf32>
    %7 = math.exp %6 : vector<8x128xf32>
    %cst_5 = arith.constant 1.000000e+00 : f32
    %8 = vector.broadcast %cst_5 : f32 to vector<8x128xf32>
    %9 = arith.addf %8, %7 : vector<8x128xf32>
    %10 = arith.divf %8, %9 : vector<8x128xf32>
    %c0_6 = arith.constant 0 : index
    %c0_7 = arith.constant 0 : index
    %11 = vector.load %arg4[%c0_6, %c0_7] : memref<128x128xf32, #tpu.memory_space<vmem>>, vector<128x128xf32>
    %c0_8 = arith.constant 0 : index
    %c0_9 = arith.constant 0 : index
    %12 = vector.load %arg5[%c0_8, %c0_9] : memref<1x128xf32, #tpu.memory_space<vmem>>, vector<1x128xf32>
    %cst_10 = arith.constant dense<0.000000e+00> : vector<8x128xf32>
    %13 = tpu.matmul %10, %11, %cst_10 {dimension_numbers = #tpu.dot_dimension_numbers<[1], [0], [0], [1], [0, 0, 1, 1], [], []>} : vector<8x128xf32>, vector<128x128xf32>, vector<8x128xf32> -> vector<8x128xf32>
    %14 = vector.broadcast %12 : vector<1x128xf32> to vector<8x128xf32>
    %15 = arith.addf %13, %14 : vector<8x128xf32>
    %16 = arith.negf %15 : vector<8x128xf32>
    %17 = math.exp %16 : vector<8x128xf32>
    %cst_11 = arith.constant 1.000000e+00 : f32
    %18 = vector.broadcast %cst_11 : f32 to vector<8x128xf32>
    %19 = arith.addf %18, %17 : vector<8x128xf32>
    %20 = arith.divf %18, %19 : vector<8x128xf32>
    %c0_12 = arith.constant 0 : index
    %c0_13 = arith.constant 0 : index
    %21 = vector.load %arg6[%c0_12, %c0_13] : memref<128x128xf32, #tpu.memory_space<vmem>>, vector<128x128xf32>
    %c0_14 = arith.constant 0 : index
    %c0_15 = arith.constant 0 : index
    %22 = vector.load %arg7[%c0_14, %c0_15] : memref<1x128xf32, #tpu.memory_space<vmem>>, vector<1x128xf32>
    %cst_16 = arith.constant dense<0.000000e+00> : vector<8x128xf32>
    %23 = tpu.matmul %20, %21, %cst_16 {dimension_numbers = #tpu.dot_dimension_numbers<[1], [0], [0], [1], [0, 0, 1, 1], [], []>} : vector<8x128xf32>, vector<128x128xf32>, vector<8x128xf32> -> vector<8x128xf32>
    %24 = vector.broadcast %22 : vector<1x128xf32> to vector<8x128xf32>
    %25 = arith.addf %23, %24 : vector<8x128xf32>
    %26 = arith.negf %25 : vector<8x128xf32>
    %27 = math.exp %26 : vector<8x128xf32>
    %cst_17 = arith.constant 1.000000e+00 : f32
    %28 = vector.broadcast %cst_17 : f32 to vector<8x128xf32>
    %29 = arith.addf %28, %27 : vector<8x128xf32>
    %30 = arith.divf %28, %29 : vector<8x128xf32>
    %c0_18 = arith.constant 0 : index
    %c0_19 = arith.constant 0 : index
    %31 = vector.load %arg8[%c0_18, %c0_19] : memref<128x128xf32, #tpu.memory_space<vmem>>, vector<128x128xf32>
    %c0_20 = arith.constant 0 : index
    %c0_21 = arith.constant 0 : index
    %32 = vector.load %arg9[%c0_20, %c0_21] : memref<1x128xf32, #tpu.memory_space<vmem>>, vector<1x128xf32>
    %cst_22 = arith.constant dense<0.000000e+00> : vector<8x128xf32>
    %33 = tpu.matmul %30, %31, %cst_22 {dimension_numbers = #tpu.dot_dimension_numbers<[1], [0], [0], [1], [0, 0, 1, 1], [], []>} : vector<8x128xf32>, vector<128x128xf32>, vector<8x128xf32> -> vector<8x128xf32>
    %34 = vector.broadcast %32 : vector<1x128xf32> to vector<8x128xf32>
    %35 = arith.addf %33, %34 : vector<8x128xf32>
    %c0_23 = arith.constant 0 : index
    %c0_24 = arith.constant 0 : index
    %36 = vector.load %arg10[%c0_23, %c0_24] : memref<8x128xf32, #tpu.memory_space<vmem>>, vector<8x128xf32>
    tpu.vector_store %arg10[%c0_23, %c0_24], %35 {strides = array<i32>} : memref<8x128xf32, #tpu.memory_space<vmem>>, vector<8x128xf32>,
    return
  }
  func.func @transform_0(%arg0: i32) -> (i32, i32) {
    %c0_i32 = arith.constant 0 : i32
    %c0_i32_0 = arith.constant 0 : i32
    return %arg0, %c0_i32 : i32, i32
  }
  func.func @transform_1(%arg0: i32) -> (i32, i32) {
    %c0_i32 = arith.constant 0 : i32
    %c0_i32_0 = arith.constant 0 : i32
    %c0_i32_1 = arith.constant 0 : i32
    return %c0_i32, %c0_i32_0 : i32, i32
  }
  func.func @transform_2(%arg0: i32) -> (i32, i32) {
    %c0_i32 = arith.constant 0 : i32
    %c0_i32_0 = arith.constant 0 : i32
    %c0_i32_1 = arith.constant 0 : i32
    return %c0_i32, %c0_i32_0 : i32, i32
  }
  func.func @transform_3(%arg0: i32) -> (i32, i32) {
    %c0_i32 = arith.constant 0 : i32
    %c0_i32_0 = arith.constant 0 : i32
    %c0_i32_1 = arith.constant 0 : i32
    return %c0_i32, %c0_i32_0 : i32, i32
  }
  func.func @transform_4(%arg0: i32) -> (i32, i32) {
    %c0_i32 = arith.constant 0 : i32
    %c0_i32_0 = arith.constant 0 : i32
    %c0_i32_1 = arith.constant 0 : i32
    return %c0_i32, %c0_i32_0 : i32, i32
  }
  func.func @transform_5(%arg0: i32) -> (i32, i32) {
    %c0_i32 = arith.constant 0 : i32
    %c0_i32_0 = arith.constant 0 : i32
    %c0_i32_1 = arith.constant 0 : i32
    return %c0_i32, %c0_i32_0 : i32, i32
  }
  func.func @transform_6(%arg0: i32) -> (i32, i32) {
    %c0_i32 = arith.constant 0 : i32
    %c0_i32_0 = arith.constant 0 : i32
    %c0_i32_1 = arith.constant 0 : i32
    return %c0_i32, %c0_i32_0 : i32, i32
  }
  func.func @transform_7(%arg0: i32) -> (i32, i32) {
    %c0_i32 = arith.constant 0 : i32
    %c0_i32_0 = arith.constant 0 : i32
    %c0_i32_1 = arith.constant 0 : i32
    return %c0_i32, %c0_i32_0 : i32, i32
  }
  func.func @transform_8(%arg0: i32) -> (i32, i32) {
    %c0_i32 = arith.constant 0 : i32
    %c0_i32_0 = arith.constant 0 : i32
    %c0_i32_1 = arith.constant 0 : i32
    return %c0_i32, %c0_i32_0 : i32, i32
  }
  func.func @transform_9(%arg0: i32) -> (i32, i32) {
    %c0_i32 = arith.constant 0 : i32
    %c0_i32_0 = arith.constant 0 : i32
    return %arg0, %c0_i32 : i32, i32
  }
}

</mosaic_0001>

<llo_original>
// kernel: _lambda_.1
$region0: #{_lambda_.1}
  #allocation0 [shape = 'u32[]', space=smem, size = 0x4, offset = 0x4, fixed_abs, tag = 'smem constant byte address 0x4 - core index']
  #allocation1 [shape = 'u32[144,128]{1,0:T(1,128)}', space=vmem, size = 0x12000, scoped, tag = 'internal scratch']
  %s0 = inlined_call_operand.hbm [shape: f32[8,16], index: 0, kind: input, shape index: {}]
  %s1 = inlined_call_operand.hbm [shape: f32[16,128], index: 1, kind: input, shape index: {}]
  %s2 = inlined_call_operand.vmem [shape: f32[1,128], index: 2, kind: input, shape index: {}]
  %s3 = inlined_call_operand.hbm [shape: f32[128,128], index: 3, kind: input, shape index: {}]
  %s4 = inlined_call_operand.vmem [shape: f32[1,128], index: 4, kind: input, shape index: {}]
  %s5 = inlined_call_operand.hbm [shape: f32[128,128], index: 5, kind: input, shape index: {}]
  %s6 = inlined_call_operand.vmem [shape: f32[1,128], index: 6, kind: input, shape index: {}]
  %s7 = inlined_call_operand.hbm [shape: f32[128,128], index: 7, kind: input, shape index: {}]
  %s8 = inlined_call_operand.vmem [shape: f32[1,128], index: 8, kind: input, shape index: {}]
  %s9 = inlined_call_operand.vmem [shape: f32[8,128], index: 9, kind: output, shape index: {}]
  %s10 = sld [smem:[#allocation0]]
  $region66: #{_lambda_.1} parent=0
    _
  %s12 = ssub.s32 1, %s10
  %s13 = scalar_select 0, %s12, %s10
  $region1: #{_lambda_.1} parent=0
    #allocation2 [shape = 'u8[4096]{0}', space=vmem, size = 0x1000, scoped, tag = 'input window, operand 0, single buffered']
    #allocation3 [shape = 's32[1]{0}', space=sflag, size = 0x4, scoped, tag = 'scoped memory for _lambda_.1']
    #allocation4 [shape = 'u8[8192]{0}', space=vmem, size = 0x2000, scoped, tag = 'input window, operand 1, single buffered']
    #allocation5 [shape = 's32[1]{0}', space=sflag, size = 0x4, scoped, tag = 'scoped memory for _lambda_.1']
    #allocation6 [shape = 'u8[65536]{0}', space=vmem, size = 0x10000, scoped, tag = 'input window, operand 3, single buffered']
    #allocation7 [shape = 'u8[65536]{0}', space=vmem, size = 0x10000, scoped, tag = 'input window, operand 5, single buffered']
    #allocation8 [shape = 's32[1]{0}', space=sflag, size = 0x4, scoped, tag = 'scoped memory for _lambda_.1']
    #allocation9 [shape = 'u8[65536]{0}', space=vmem, size = 0x10000, scoped, tag = 'input window, operand 7, single buffered']
    %14 = vsyncpa [#allocation3], 0
    %15 = vsyncpa [#allocation5], 0
    %16 = vsyncpa [#allocation8], 0
    // Predicated region
    $region2: #{_lambda_.1} parent=1 // pred_check
      _
    $region3: #{_lambda_.1} parent=1 // pred_check_branch
      %18 = sbr.rel (0) target = $region5
    $region4: #{_lambda_.1} parent=1 // pred_region
      %s20 = ssub.s32 128, 128
      %21 = vsyncadd [#allocation3], %s20
      %s23 = sshll.u32 [#allocation2], 4
      %s24 = int_to_ptr.vmem [resolvable:$true] %s23
      %26 = dma.hbm_to_vmem [thread:$0]  %s0, 128, %s24, [#allocation3]
    $region5: #{_lambda_.1} parent=1 // pred_fallthru
      _
    // Predicated region
    $region6: #{_lambda_.1} parent=1 // pred_check
      _
    $region7: #{_lambda_.1} parent=1 // pred_check_branch
      %28 = sbr.rel (0) target = $region9
    $region8: #{_lambda_.1} parent=1 // pred_region
      %s30 = ssub.s32 256, 256
      %31 = vsyncadd [#allocation5], %s30
      %s32 = sshll.u32 [#allocation4], 4
      %s33 = int_to_ptr.vmem [resolvable:$true] %s32
      %38 = dma.hbm_to_vmem [thread:$0]  %s1, 256, %s33, [#allocation5], 128, 128, 8
    $region9: #{_lambda_.1} parent=1 // pred_fallthru
      _
    // Predicated region
    $region10: #{_lambda_.1} parent=1 // pred_check
      _
    $region11: #{_lambda_.1} parent=1 // pred_check_branch
      %40 = sbr.rel (0) target = $region13
    $region12: #{_lambda_.1} parent=1 // pred_region
      _
    $region13: #{_lambda_.1} parent=1 // pred_fallthru
      _
    // Predicated region
    $region14: #{_lambda_.1} parent=1 // pred_check
      _
    $region15: #{_lambda_.1} parent=1 // pred_check_branch
      %42 = sbr.rel (0) target = $region17
    $region16: #{_lambda_.1} parent=1 // pred_region
      %s44 = ssub.s32 2048, 2048
      %45 = vsyncadd [#allocation5], %s44
      %s46 = sshll.u32 [#allocation6], 4
      %s47 = int_to_ptr.vmem [resolvable:$true] %s46
      %52 = dma.hbm_to_vmem [thread:$0]  %s3, 2048, %s47, [#allocation5], 128, 128, 8
    $region17: #{_lambda_.1} parent=1 // pred_fallthru
      _
    // Predicated region
    $region18: #{_lambda_.1} parent=1 // pred_check
      _
    $region19: #{_lambda_.1} parent=1 // pred_check_branch
      %54 = sbr.rel (0) target = $region21
    $region20: #{_lambda_.1} parent=1 // pred_region
      _
    $region21: #{_lambda_.1} parent=1 // pred_fallthru
      _
    // Predicated region
    $region22: #{_lambda_.1} parent=1 // pred_check
      _
    $region23: #{_lambda_.1} parent=1 // pred_check_branch
      %56 = sbr.rel (0) target = $region25
    $region24: #{_lambda_.1} parent=1 // pred_region
      %s58 = ssub.s32 2048, 2048
      %59 = vsyncadd [#allocation8], %s58
      %s60 = sshll.u32 [#allocation7], 4
      %s61 = int_to_ptr.vmem [resolvable:$true] %s60
      %66 = dma.hbm_to_vmem [thread:$0]  %s5, 2048, %s61, [#allocation8], 128, 128, 8
    $region25: #{_lambda_.1} parent=1 // pred_fallthru
      _
    // Predicated region
    $region26: #{_lambda_.1} parent=1 // pred_check
      _
    $region27: #{_lambda_.1} parent=1 // pred_check_branch
      %68 = sbr.rel (0) target = $region29
    $region28: #{_lambda_.1} parent=1 // pred_region
      _
    $region29: #{_lambda_.1} parent=1 // pred_fallthru
      _
    // Predicated region
    $region30: #{_lambda_.1} parent=1 // pred_check
      _
    $region31: #{_lambda_.1} parent=1 // pred_check_branch
      %70 = sbr.rel (0) target = $region33
    $region32: #{_lambda_.1} parent=1 // pred_region
      %s72 = ssub.s32 2048, 2048
      %73 = vsyncadd [#allocation8], %s72
      %s74 = sshll.u32 [#allocation9], 4
      %s75 = int_to_ptr.vmem [resolvable:$true] %s74
      %80 = dma.hbm_to_vmem [thread:$0]  %s7, 2048, %s75, [#allocation8], 128, 128, 8
    $region33: #{_lambda_.1} parent=1 // pred_fallthru
      _
    // Predicated region
    $region34: #{_lambda_.1} parent=1 // pred_check
      _
    $region35: #{_lambda_.1} parent=1 // pred_check_branch
      %82 = sbr.rel (0) target = $region37
    $region36: #{_lambda_.1} parent=1 // pred_region
      _
    $region37: #{_lambda_.1} parent=1 // pred_fallthru
      _
    // Predicated region
    $region38: #{_lambda_.1} parent=1 // pred_check
      _
    $region39: #{_lambda_.1} parent=1 // pred_check_branch
      %84 = sbr.rel (0) target = $region41
    $region40: #{_lambda_.1} parent=1 // pred_region
      %85 = dma.done [#allocation3], 128
    $region41: #{_lambda_.1} parent=1 // pred_fallthru
      _
    // Predicated region
    $region42: #{_lambda_.1} parent=1 // pred_check
      _
    $region43: #{_lambda_.1} parent=1 // pred_check_branch
      %87 = sbr.rel (0) target = $region45
    $region44: #{_lambda_.1} parent=1 // pred_region
      %88 = dma.done [#allocation5], 256
    $region45: #{_lambda_.1} parent=1 // pred_fallthru
      _
    // Predicated region
    $region46: #{_lambda_.1} parent=1 // pred_check
      _
    $region47: #{_lambda_.1} parent=1 // pred_check_branch
      %90 = sbr.rel (0) target = $region49
    $region48: #{_lambda_.1} parent=1 // pred_region
      %91 = dma.done [#allocation5], 2048
    $region49: #{_lambda_.1} parent=1 // pred_fallthru
      _
    // Predicated region
    $region50: #{_lambda_.1} parent=1 // pred_check
      _
    $region51: #{_lambda_.1} parent=1 // pred_check_branch
      %93 = sbr.rel (0) target = $region53
    $region52: #{_lambda_.1} parent=1 // pred_region
      %94 = dma.done [#allocation8], 2048
    $region53: #{_lambda_.1} parent=1 // pred_fallthru
      _
    // Predicated region
    $region54: #{_lambda_.1} parent=1 // pred_check
      _
    $region55: #{_lambda_.1} parent=1 // pred_check_branch
      %96 = sbr.rel (0) target = $region57
    $region56: #{_lambda_.1} parent=1 // pred_region
      %97 = dma.done [#allocation8], 2048
    $region57: #{_lambda_.1} parent=1 // pred_fallthru
      _
    %v98 = vld [vmem:[#allocation2] sm:$0xff]
    %v99 = vld [vmem:[#allocation4] sm:$0xff]
    %v100 = vld [vmem:[#allocation4 + $0x8] sm:$0xff]
    %v101 = vld [vmem:[%s2] sm:$0x1]
    %v103 = vlaneseq
    %v104 = vshrl.u32 %v103, 7
    %v105 = vsub.s32 0, %v104
    %v106 = vrot.slane %v101, %v105
    %vm108 = vcmask 130048
    %v110 = vsel %vm108, %v98, 0
    %112 = vmatprep.subr.mxu0 0.0
    %113 = vmatpush1.msra.mxu0 0.0
    %114 = vmatprep.subr.mxu0 0.0
    %115 = vmatpush1.msra.mxu0 0.0
    %116 = vmatprep.subr.mxu0 0.0
    %117 = vmatpush1.msra.mxu0 0.0
    %118 = vmatprep.subr.mxu0 0.0
    %119 = vmatpush1.msra.mxu0 0.0
    %120 = vmatprep.subr.mxu0 0.0
    %121 = vmatpush1.msra.mxu0 0.0
    %122 = vmatprep.subr.mxu0 0.0
    %123 = vmatpush1.msra.mxu0 0.0
    %124 = vmatprep.subr.mxu0 0.0
    %125 = vmatpush1.msra.mxu0 0.0
    %126 = vmatprep.subr.mxu0 0.0
    %127 = vmatpush1.msra.mxu0 0.0
    %128 = vmatprep.subr.mxu0 0.0
    %129 = vmatpush1.msra.mxu0 0.0
    %130 = vmatprep.subr.mxu0 0.0
    %131 = vmatpush1.msra.mxu0 0.0
    %132 = vmatprep.subr.mxu0 0.0
    %133 = vmatpush1.msra.mxu0 0.0
    %134 = vmatprep.subr.mxu0 0.0
    %135 = vmatpush1.msra.mxu0 0.0
    %136 = vmatprep.subr.mxu0 0.0
    %137 = vmatpush1.msra.mxu0 0.0
    %138 = vmatprep.subr.mxu0 0.0
    %139 = vmatpush1.msra.mxu0 0.0
    %140 = vmatprep.subr.mxu0 0.0
    %141 = vmatpush1.msra.mxu0 %v100
    %142 = vmatprep.subr.mxu0 0.0
    %143 = vmatpush1.msra.mxu0 %v99
    %144 = vmatprep.subr.mxu0 0.0
    %145 = vmatpush2.msra.mxu0 0.0
    %146 = vmatprep.subr.mxu0 0.0
    %147 = vmatpush2.msra.mxu0 0.0
    %148 = vmatprep.subr.mxu0 0.0
    %149 = vmatpush2.msra.mxu0 0.0
    %150 = vmatprep.subr.mxu0 0.0
    %151 = vmatpush2.msra.mxu0 0.0
    %152 = vmatprep.subr.mxu0 0.0
    %153 = vmatpush2.msra.mxu0 0.0
    %154 = vmatprep.subr.mxu0 0.0
    %155 = vmatpush2.msra.mxu0 0.0
    %156 = vmatprep.subr.mxu0 0.0
    %157 = vmatpush2.msra.mxu0 0.0
    %158 = vmatprep.subr.mxu0 0.0
    %159 = vmatpush2.msra.mxu0 0.0
    %160 = vmatprep.subr.mxu0 0.0
    %161 = vmatpush2.msra.mxu0 0.0
    %162 = vmatprep.subr.mxu0 0.0
    %163 = vmatpush2.msra.mxu0 0.0
    %164 = vmatprep.subr.mxu0 0.0
    %165 = vmatpush2.msra.mxu0 0.0
    %166 = vmatprep.subr.mxu0 0.0
    %167 = vmatpush2.msra.mxu0 0.0
    %168 = vmatprep.subr.mxu0 0.0
    %169 = vmatpush2.msra.mxu0 0.0
    %170 = vmatprep.subr.mxu0 0.0
    %171 = vmatpush2.msra.mxu0 0.0
    %172 = vmatprep.subr.mxu0 0.0
    %173 = vmatpush2.msra.mxu0 0.0
    %174 = vmatprep.subr.mxu0 0.0
    %175 = vmatpush2.msra.mxu0 0.0
    %176 = vmatprep.mubr.f32.mxu0 0.0
    %177 = vmatmul.mubr.f32.gmra.mxu0 %v110
    %v178 = vpop.f32.mrf.mxu0
    %v179 = vadd.f32 %v106, %v178
    %v180 = vpop.f32.mrf.mxu0
    %181 = vdwg.mxu0
    %v182 = vxor.u32 %v179, 2147483648
    %v183 = vmul.f32 %v182, 1.442695
    %v184 = vpow.pop %v183
    %v185 = vadd.f32 %v184, 1.0
    %v186 = vrcp.pop %v185
    %v187 = vmul.f32 1.0, %v186
    %v188 = vld [vmem:[#allocation6] sm:$0xff]
    %v189 = vld [vmem:[#allocation6 + $0x8] sm:$0xff]
    %v190 = vld [vmem:[#allocation6 + $0x10] sm:$0xff]
    %v191 = vld [vmem:[#allocation6 + $0x18] sm:$0xff]
    %v192 = vld [vmem:[#allocation6 + $0x20] sm:$0xff]
    %v193 = vld [vmem:[#allocation6 + $0x28] sm:$0xff]
    %v194 = vld [vmem:[#allocation6 + $0x30] sm:$0xff]
    %v195 = vld [vmem:[#allocation6 + $0x38] sm:$0xff]
    %v196 = vld [vmem:[#allocation6 + $0x40] sm:$0xff]
    %v197 = vld [vmem:[#allocation6 + $0x48] sm:$0xff]
    %v198 = vld [vmem:[#allocation6 + $0x50] sm:$0xff]
    %v199 = vld [vmem:[#allocation6 + $0x58] sm:$0xff]
    %v200 = vld [vmem:[#allocation6 + $0x60] sm:$0xff]
    %v201 = vld [vmem:[#allocation6 + $0x68] sm:$0xff]
    %v202 = vld [vmem:[#allocation6 + $0x70] sm:$0xff]
    %v203 = vld [vmem:[#allocation6 + $0x78] sm:$0xff]
    %v204 = vld [vmem:[%s4] sm:$0x1]
    %v206 = vlaneseq
    %v207 = vshrl.u32 %v206, 7
    %v208 = vsub.s32 0, %v207
    %v209 = vrot.slane %v204, %v208
    %211 = vmatprep.subr.mxu0 0.0
    %212 = vmatpush1.msra.mxu0 %v203
    %213 = vmatprep.subr.mxu0 0.0
    %214 = vmatpush1.msra.mxu0 %v202
    %215 = vmatprep.subr.mxu0 0.0
    %216 = vmatpush1.msra.mxu0 %v201
    %217 = vmatprep.subr.mxu0 0.0
    %218 = vmatpush1.msra.mxu0 %v200
    %219 = vmatprep.subr.mxu0 0.0
    %220 = vmatpush1.msra.mxu0 %v199
    %221 = vmatprep.subr.mxu0 0.0
    %222 = vmatpush1.msra.mxu0 %v198
    %223 = vmatprep.subr.mxu0 0.0
    %224 = vmatpush1.msra.mxu0 %v197
    %225 = vmatprep.subr.mxu0 0.0
    %226 = vmatpush1.msra.mxu0 %v196
    %227 = vmatprep.subr.mxu0 0.0
    %228 = vmatpush1.msra.mxu0 %v195
    %229 = vmatprep.subr.mxu0 0.0
    %230 = vmatpush1.msra.mxu0 %v194
    %231 = vmatprep.subr.mxu0 0.0
    %232 = vmatpush1.msra.mxu0 %v193
    %233 = vmatprep.subr.mxu0 0.0
    %234 = vmatpush1.msra.mxu0 %v192
    %235 = vmatprep.subr.mxu0 0.0
    %236 = vmatpush1.msra.mxu0 %v191
    %237 = vmatprep.subr.mxu0 0.0
    %238 = vmatpush1.msra.mxu0 %v190
    %239 = vmatprep.subr.mxu0 0.0
    %240 = vmatpush1.msra.mxu0 %v189
    %241 = vmatprep.subr.mxu0 0.0
    %242 = vmatpush1.msra.mxu0 %v188
    %243 = vmatprep.subr.mxu0 0.0
    %244 = vmatpush2.msra.mxu0 0.0
    %245 = vmatprep.subr.mxu0 0.0
    %246 = vmatpush2.msra.mxu0 0.0
    %247 = vmatprep.subr.mxu0 0.0
    %248 = vmatpush2.msra.mxu0 0.0
    %249 = vmatprep.subr.mxu0 0.0
    %250 = vmatpush2.msra.mxu0 0.0
    %251 = vmatprep.subr.mxu0 0.0
    %252 = vmatpush2.msra.mxu0 0.0
    %253 = vmatprep.subr.mxu0 0.0
    %254 = vmatpush2.msra.mxu0 0.0
    %255 = vmatprep.subr.mxu0 0.0
    %256 = vmatpush2.msra.mxu0 0.0
    %257 = vmatprep.subr.mxu0 0.0
    %258 = vmatpush2.msra.mxu0 0.0
    %259 = vmatprep.subr.mxu0 0.0
    %260 = vmatpush2.msra.mxu0 0.0
    %261 = vmatprep.subr.mxu0 0.0
    %262 = vmatpush2.msra.mxu0 0.0
    %263 = vmatprep.subr.mxu0 0.0
    %264 = vmatpush2.msra.mxu0 0.0
    %265 = vmatprep.subr.mxu0 0.0
    %266 = vmatpush2.msra.mxu0 0.0
    %267 = vmatprep.subr.mxu0 0.0
    %268 = vmatpush2.msra.mxu0 0.0
    %269 = vmatprep.subr.mxu0 0.0
    %270 = vmatpush2.msra.mxu0 0.0
    %271 = vmatprep.subr.mxu0 0.0
    %272 = vmatpush2.msra.mxu0 0.0
    %273 = vmatprep.subr.mxu0 0.0
    %274 = vmatpush2.msra.mxu0 0.0
    %275 = vmatprep.mubr.f32.mxu0 0.0
    %276 = vmatmul.mubr.f32.gmra.mxu0 %v187
    %v277 = vpop.f32.mrf.mxu0
    %v278 = vadd.f32 %v209, %v277
    %v279 = vpop.f32.mrf.mxu0
    %280 = vdwg.mxu0
    %v281 = vxor.u32 %v278, 2147483648
    %v282 = vmul.f32 %v281, 1.442695
    %v283 = vpow.pop %v282
    %v284 = vadd.f32 %v283, 1.0
    %v285 = vrcp.pop %v284
    %v286 = vmul.f32 1.0, %v285
    %v287 = vld [vmem:[#allocation7] sm:$0xff]
    %v288 = vld [vmem:[#allocation7 + $0x8] sm:$0xff]
    %v289 = vld [vmem:[#allocation7 + $0x10] sm:$0xff]
    %v290 = vld [vmem:[#allocation7 + $0x18] sm:$0xff]
    %v291 = vld [vmem:[#allocation7 + $0x20] sm:$0xff]
    %v292 = vld [vmem:[#allocation7 + $0x28] sm:$0xff]
    %v293 = vld [vmem:[#allocation7 + $0x30] sm:$0xff]
    %v294 = vld [vmem:[#allocation7 + $0x38] sm:$0xff]
    %v295 = vld [vmem:[#allocation7 + $0x40] sm:$0xff]
    %v296 = vld [vmem:[#allocation7 + $0x48] sm:$0xff]
    %v297 = vld [vmem:[#allocation7 + $0x50] sm:$0xff]
    %v298 = vld [vmem:[#allocation7 + $0x58] sm:$0xff]
    %v299 = vld [vmem:[#allocation7 + $0x60] sm:$0xff]
    %v300 = vld [vmem:[#allocation7 + $0x68] sm:$0xff]
    %v301 = vld [vmem:[#allocation7 + $0x70] sm:$0xff]
    %v302 = vld [vmem:[#allocation7 + $0x78] sm:$0xff]
    %v303 = vld [vmem:[%s6] sm:$0x1]
    %v305 = vlaneseq
    %v306 = vshrl.u32 %v305, 7
    %v307 = vsub.s32 0, %v306
    %v308 = vrot.slane %v303, %v307
    %310 = vmatprep.subr.mxu0 0.0
    %311 = vmatpush1.msra.mxu0 %v302
    %312 = vmatprep.subr.mxu0 0.0
    %313 = vmatpush1.msra.mxu0 %v301
    %314 = vmatprep.subr.mxu0 0.0
    %315 = vmatpush1.msra.mxu0 %v300
    %316 = vmatprep.subr.mxu0 0.0
    %317 = vmatpush1.msra.mxu0 %v299
    %318 = vmatprep.subr.mxu0 0.0
    %319 = vmatpush1.msra.mxu0 %v298
    %320 = vmatprep.subr.mxu0 0.0
    %321 = vmatpush1.msra.mxu0 %v297
    %322 = vmatprep.subr.mxu0 0.0
    %323 = vmatpush1.msra.mxu0 %v296
    %324 = vmatprep.subr.mxu0 0.0
    %325 = vmatpush1.msra.mxu0 %v295
    %326 = vmatprep.subr.mxu0 0.0
    %327 = vmatpush1.msra.mxu0 %v294
    %328 = vmatprep.subr.mxu0 0.0
    %329 = vmatpush1.msra.mxu0 %v293
    %330 = vmatprep.subr.mxu0 0.0
    %331 = vmatpush1.msra.mxu0 %v292
    %332 = vmatprep.subr.mxu0 0.0
    %333 = vmatpush1.msra.mxu0 %v291
    %334 = vmatprep.subr.mxu0 0.0
    %335 = vmatpush1.msra.mxu0 %v290
    %336 = vmatprep.subr.mxu0 0.0
    %337 = vmatpush1.msra.mxu0 %v289
    %338 = vmatprep.subr.mxu0 0.0
    %339 = vmatpush1.msra.mxu0 %v288
    %340 = vmatprep.subr.mxu0 0.0
    %341 = vmatpush1.msra.mxu0 %v287
    %342 = vmatprep.subr.mxu0 0.0
    %343 = vmatpush2.msra.mxu0 0.0
    %344 = vmatprep.subr.mxu0 0.0
    %345 = vmatpush2.msra.mxu0 0.0
    %346 = vmatprep.subr.mxu0 0.0
    %347 = vmatpush2.msra.mxu0 0.0
    %348 = vmatprep.subr.mxu0 0.0
    %349 = vmatpush2.msra.mxu0 0.0
    %350 = vmatprep.subr.mxu0 0.0
    %351 = vmatpush2.msra.mxu0 0.0
    %352 = vmatprep.subr.mxu0 0.0
    %353 = vmatpush2.msra.mxu0 0.0
    %354 = vmatprep.subr.mxu0 0.0
    %355 = vmatpush2.msra.mxu0 0.0
    %356 = vmatprep.subr.mxu0 0.0
    %357 = vmatpush2.msra.mxu0 0.0
    %358 = vmatprep.subr.mxu0 0.0
    %359 = vmatpush2.msra.mxu0 0.0
    %360 = vmatprep.subr.mxu0 0.0
    %361 = vmatpush2.msra.mxu0 0.0
    %362 = vmatprep.subr.mxu0 0.0
    %363 = vmatpush2.msra.mxu0 0.0
    %364 = vmatprep.subr.mxu0 0.0
    %365 = vmatpush2.msra.mxu0 0.0
    %366 = vmatprep.subr.mxu0 0.0
    %367 = vmatpush2.msra.mxu0 0.0
    %368 = vmatprep.subr.mxu0 0.0
    %369 = vmatpush2.msra.mxu0 0.0
    %370 = vmatprep.subr.mxu0 0.0
    %371 = vmatpush2.msra.mxu0 0.0
    %372 = vmatprep.subr.mxu0 0.0
    %373 = vmatpush2.msra.mxu0 0.0
    %374 = vmatprep.mubr.f32.mxu0 0.0
    %375 = vmatmul.mubr.f32.gmra.mxu0 %v286
    %v376 = vpop.f32.mrf.mxu0
    %v377 = vadd.f32 %v308, %v376
    %v378 = vpop.f32.mrf.mxu0
    %379 = vdwg.mxu0
    %v380 = vxor.u32 %v377, 2147483648
    %v381 = vmul.f32 %v380, 1.442695
    %v382 = vpow.pop %v381
    %v383 = vadd.f32 %v382, 1.0
    %v384 = vrcp.pop %v383
    %v385 = vmul.f32 1.0, %v384
    %v386 = vld [vmem:[#allocation9] sm:$0xff]
    %v387 = vld [vmem:[#allocation9 + $0x8] sm:$0xff]
    %v388 = vld [vmem:[#allocation9 + $0x10] sm:$0xff]
    %v389 = vld [vmem:[#allocation9 + $0x18] sm:$0xff]
    %v390 = vld [vmem:[#allocation9 + $0x20] sm:$0xff]
    %v391 = vld [vmem:[#allocation9 + $0x28] sm:$0xff]
    %v392 = vld [vmem:[#allocation9 + $0x30] sm:$0xff]
    %v393 = vld [vmem:[#allocation9 + $0x38] sm:$0xff]
    %v394 = vld [vmem:[#allocation9 + $0x40] sm:$0xff]
    %v395 = vld [vmem:[#allocation9 + $0x48] sm:$0xff]
    %v396 = vld [vmem:[#allocation9 + $0x50] sm:$0xff]
    %v397 = vld [vmem:[#allocation9 + $0x58] sm:$0xff]
    %v398 = vld [vmem:[#allocation9 + $0x60] sm:$0xff]
    %v399 = vld [vmem:[#allocation9 + $0x68] sm:$0xff]
    %v400 = vld [vmem:[#allocation9 + $0x70] sm:$0xff]
    %v401 = vld [vmem:[#allocation9 + $0x78] sm:$0xff]
    %v402 = vld [vmem:[%s8] sm:$0x1]
    %v404 = vlaneseq
    %v405 = vshrl.u32 %v404, 7
    %v406 = vsub.s32 0, %v405
    %v407 = vrot.slane %v402, %v406
    %409 = vmatprep.subr.mxu0 0.0
    %410 = vmatpush1.msra.mxu0 %v401
    %411 = vmatprep.subr.mxu0 0.0
    %412 = vmatpush1.msra.mxu0 %v400
    %413 = vmatprep.subr.mxu0 0.0
    %414 = vmatpush1.msra.mxu0 %v399
    %415 = vmatprep.subr.mxu0 0.0
    %416 = vmatpush1.msra.mxu0 %v398
    %417 = vmatprep.subr.mxu0 0.0
    %418 = vmatpush1.msra.mxu0 %v397
    %419 = vmatprep.subr.mxu0 0.0
    %420 = vmatpush1.msra.mxu0 %v396
    %421 = vmatprep.subr.mxu0 0.0
    %422 = vmatpush1.msra.mxu0 %v395
    %423 = vmatprep.subr.mxu0 0.0
    %424 = vmatpush1.msra.mxu0 %v394
    %425 = vmatprep.subr.mxu0 0.0
    %426 = vmatpush1.msra.mxu0 %v393
    %427 = vmatprep.subr.mxu0 0.0
    %428 = vmatpush1.msra.mxu0 %v392
    %429 = vmatprep.subr.mxu0 0.0
    %430 = vmatpush1.msra.mxu0 %v391
    %431 = vmatprep.subr.mxu0 0.0
    %432 = vmatpush1.msra.mxu0 %v390
    %433 = vmatprep.subr.mxu0 0.0
    %434 = vmatpush1.msra.mxu0 %v389
    %435 = vmatprep.subr.mxu0 0.0
    %436 = vmatpush1.msra.mxu0 %v388
    %437 = vmatprep.subr.mxu0 0.0
    %438 = vmatpush1.msra.mxu0 %v387
    %439 = vmatprep.subr.mxu0 0.0
    %440 = vmatpush1.msra.mxu0 %v386
    %441 = vmatprep.subr.mxu0 0.0
    %442 = vmatpush2.msra.mxu0 0.0
    %443 = vmatprep.subr.mxu0 0.0
    %444 = vmatpush2.msra.mxu0 0.0
    %445 = vmatprep.subr.mxu0 0.0
    %446 = vmatpush2.msra.mxu0 0.0
    %447 = vmatprep.subr.mxu0 0.0
    %448 = vmatpush2.msra.mxu0 0.0
    %449 = vmatprep.subr.mxu0 0.0
    %450 = vmatpush2.msra.mxu0 0.0
    %451 = vmatprep.subr.mxu0 0.0
    %452 = vmatpush2.msra.mxu0 0.0
    %453 = vmatprep.subr.mxu0 0.0
    %454 = vmatpush2.msra.mxu0 0.0
    %455 = vmatprep.subr.mxu0 0.0
    %456 = vmatpush2.msra.mxu0 0.0
    %457 = vmatprep.subr.mxu0 0.0
    %458 = vmatpush2.msra.mxu0 0.0
    %459 = vmatprep.subr.mxu0 0.0
    %460 = vmatpush2.msra.mxu0 0.0
    %461 = vmatprep.subr.mxu0 0.0
    %462 = vmatpush2.msra.mxu0 0.0
    %463 = vmatprep.subr.mxu0 0.0
    %464 = vmatpush2.msra.mxu0 0.0
    %465 = vmatprep.subr.mxu0 0.0
    %466 = vmatpush2.msra.mxu0 0.0
    %467 = vmatprep.subr.mxu0 0.0
    %468 = vmatpush2.msra.mxu0 0.0
    %469 = vmatprep.subr.mxu0 0.0
    %470 = vmatpush2.msra.mxu0 0.0
    %471 = vmatprep.subr.mxu0 0.0
    %472 = vmatpush2.msra.mxu0 0.0
    %473 = vmatprep.mubr.f32.mxu0 0.0
    %474 = vmatmul.mubr.f32.gmra.mxu0 %v385
    %v475 = vpop.f32.mrf.mxu0
    %v476 = vadd.f32 %v407, %v475
    %v477 = vpop.f32.mrf.mxu0
    %478 = vdwg.mxu0
    %479 = vst [vmem:[%s9] sm:$0xff] %v476
    // Predicated region
    $region58: #{_lambda_.1} parent=1 // pred_check
      _
    $region59: #{_lambda_.1} parent=1 // pred_check_branch
      %481 = sbr.rel (0) target = $region61
    $region60: #{_lambda_.1} parent=1 // pred_region
      _
    $region61: #{_lambda_.1} parent=1 // pred_fallthru
      _
    // Predicated region
    $region62: #{_lambda_.1} parent=1 // pred_check
      _
    $region63: #{_lambda_.1} parent=1 // pred_check_branch
      %483 = sbr.rel (0) target = $region65
    $region64: #{_lambda_.1} parent=1 // pred_region
      _
    $region65: #{_lambda_.1} parent=1 // pred_fallthru
      _
    %484 = vsyncpa [#allocation3], 1
    %485 = vsyncpa [#allocation5], 1
    %486 = vsyncpa [#allocation8], 1

</llo_original>
